<compile_context>
chip_gen: v7x
topology: tpu7x:2x2x1
jax: 0.10.0
libtpu: 0.0.40
codegen_flags: <defaults>
</compile_context>

<pallas_src>
import math

import jax
import jax.numpy as jnp
from jax.experimental import pallas as pl
from jax.experimental.pallas import tpu as pltpu


def _round_up(x, m):
    return ((x + m - 1) // m) * m


# ---------------------------------------------------------------------------
# Fused Pallas kernel: split-K Linear + ELU + fused-gate GRUCell
# ---------------------------------------------------------------------------
def _recurrent_kernel(es_ref, ac_ref, h_ref,
                      wls_ref, wla_ref, blin_ref,
                      wi_ref, wh_ref, bi_ref, bhn_ref,
                      o_ref):
    dp = o_ref.shape[-1]                     # 128-padded deterministic size

    # Linear(stoch+action -> hidden) with the K dim pre-split (no concat),
    # then ELU(alpha=1).  Padded hidden lanes come out as ELU(0) = 0.
    pre = (jnp.dot(es_ref[...], wls_ref[...], preferred_element_type=jnp.float32)
           + jnp.dot(ac_ref[...], wla_ref[...], preferred_element_type=jnp.float32)
           + blin_ref[...])
    a = jnp.where(pre > 0.0, pre, jnp.exp(jnp.minimum(pre, 0.0)) - 1.0)

    # Two fused gate matmuls.  Column blocks: [ r | z | n ] for the input side
    # and [ r | z | n | identity ] for the hidden side (the identity block
    # reproduces the previous state, zero-padded to dp lanes, for free).
    gi = jnp.dot(a, wi_ref[...], preferred_element_type=jnp.float32) + bi_ref[...]
    gh = jnp.dot(h_ref[...], wh_ref[...], preferred_element_type=jnp.float32)

    def sig(t):
        return 1.0 / (1.0 + jnp.exp(-t))     # exp rides the EUP slot

    # Consume each gate pair immediately to keep live intermediates small.
    r = sig(gi[:, 0:dp] + gh[:, 0:dp])                       # b_ir+b_hr folded
    z = sig(gi[:, dp:2 * dp] + gh[:, dp:2 * dp])             # b_iz+b_hz folded
    n = jnp.tanh(gi[:, 2 * dp:3 * dp]
                 + r * (gh[:, 2 * dp:3 * dp] + bhn_ref[...]))  # b_hn inside r*()
    h_prev = gh[:, 3 * dp:4 * dp]             # previous h, lane-padded with 0s
    o_ref[...] = ((1.0 - z) * n + z * h_prev).astype(o_ref.dtype)


def recurrent_forward(embedded_state, action, deterministic, params, *,
                      tm_max=128):
    """embedded_state [B, stoch], action [B, act], deterministic [B, deter]
    -> new deterministic state [B, deter]."""
    w_lin_s, w_lin_a, b_lin, w_i, w_h, b_i, b_hn = params
    B = embedded_state.shape[0]
    deter = deterministic.shape[1]
    dp = b_hn.shape[-1]                       # 128-padded deterministic size

    es = embedded_state.astype(jnp.float32)
    ac = action.astype(jnp.float32)
    h = deterministic.astype(jnp.float32)

    if B <= tm_max:
        # Single grid step: the grid is a serial loop on single-TensorCore
        # chips (v5e/v6e), so never split small batches.  Block rows == full
        # array dim, so no batch padding / extra HBM copies are needed.
        tm, n_steps = B, 1
    else:
        tm = tm_max
        n_steps = pl.cdiv(B, tm)
        bp = n_steps * tm
        if bp != B:
            # Zero-pad so padded rows stay finite through exp/tanh.
            pad = ((0, bp - B), (0, 0))
            es, ac, h = jnp.pad(es, pad), jnp.pad(ac, pad), jnp.pad(h, pad)

    def act_spec(cols):
        return pl.BlockSpec((tm, cols), lambda i: (i, 0))

    def const_spec(arr):
        # Block == full array shape, constant index_map -> stays VMEM-resident
        # across grid steps.
        return pl.BlockSpec(arr.shape, lambda i: (0, 0))

    out = pl.pallas_call(
        _recurrent_kernel,
        out_shape=jax.ShapeDtypeStruct((tm * n_steps, dp), jnp.float32),
        grid_spec=pltpu.PrefetchScalarGridSpec(
            num_scalar_prefetch=0,
            grid=(n_steps,),
            in_specs=[
                act_spec(es.shape[1]),          # embedded_state
                act_spec(ac.shape[1]),          # action
                act_spec(h.shape[1]),           # previous deterministic state
                const_spec(w_lin_s), const_spec(w_lin_a), const_spec(b_lin),
                const_spec(w_i), const_spec(w_h),
                const_spec(b_i), const_spec(b_hn),
            ],
            out_specs=pl.BlockSpec((tm, dp), lambda i: (i, 0)),
        ),
        compiler_params=pltpu.CompilerParams(
            dimension_semantics=("parallel",)),
    )(es, ac, h, w_lin_s, w_lin_a, b_lin, w_i, w_h, b_i, b_hn)

    return out[:B, :deter]


# ---------------------------------------------------------------------------
# RecurrentModel
# ---------------------------------------------------------------------------
class RecurrentModel:
    def __init__(self, action_size, stochastic_size, deterministic_size,
                 hidden_size, key):
        self.action_size = action_size
        self.stochastic_size = stochastic_size
        self.deterministic_size = deterministic_size
        self.hidden_size = hidden_size

        H, D = hidden_size, deterministic_size
        Hp, Dp = _round_up(H, 128), _round_up(D, 128)
        d_in = stochastic_size + action_size
        keys = jax.random.split(key, 15)

        # nn.Linear default init: weight, bias ~ U(-1/sqrt(fan_in), 1/sqrt(fan_in)).
        kb = 1.0 / math.sqrt(d_in)
        w_lin_s = jax.random.uniform(keys[0], (stochastic_size, H), jnp.float32, -kb, kb)
        w_lin_a = jax.random.uniform(keys[1], (action_size, H), jnp.float32, -kb, kb)
        b_lin = jax.random.uniform(keys[2], (H,), jnp.float32, -kb, kb)

        # nn.GRUCell default init: every weight/bias ~ U(-1/sqrt(D), 1/sqrt(D)).
        kg = 1.0 / math.sqrt(D)

        def u(k, shape):
            return jax.random.uniform(k, shape, jnp.float32, -kg, kg)

        w_ir, w_iz, w_in = u(keys[3], (H, D)), u(keys[4], (H, D)), u(keys[5], (H, D))
        w_hr, w_hz, w_hn = u(keys[6], (D, D)), u(keys[7], (D, D)), u(keys[8], (D, D))
        b_ir, b_iz, b_in = u(keys[9], (D,)), u(keys[10], (D,)), u(keys[11], (D,))
        b_hr, b_hz, b_hn = u(keys[12], (D,)), u(keys[13], (D,)), u(keys[14], (D,))

        # Un-padded pieces kept for the pure-JAX reference check.
        self._raw = dict(w_lin_s=w_lin_s, w_lin_a=w_lin_a, b_lin=b_lin,
                         w_ir=w_ir, w_iz=w_iz, w_in=w_in,
                         w_hr=w_hr, w_hz=w_hz, w_hn=w_hn,
                         b_ir=b_ir, b_iz=b_iz, b_in=b_in,
                         b_hr=b_hr, b_hz=b_hz, b_hn=b_hn)

        # --- kernel layout: 128-lane-padded, gates fused along N -----------
        def pad_cols(w, cols):
            return jnp.pad(w, ((0, 0), (0, cols - w.shape[1])))

        self.w_lin_s = pad_cols(w_lin_s, Hp)                 # [stoch, Hp]
        self.w_lin_a = pad_cols(w_lin_a, Hp)                 # [act,   Hp]
        self.b_lin = pad_cols(b_lin[None, :], Hp)            # [1,     Hp]

        w_i = jnp.zeros((Hp, 3 * Dp), jnp.float32)           # [ r | z | n ]
        w_i = (w_i.at[:H, 0:D].set(w_ir)
                  .at[:H, Dp:Dp + D].set(w_iz)
                  .at[:H, 2 * Dp:2 * Dp + D].set(w_in))
        self.w_i = w_i

        w_h = jnp.zeros((D, 4 * Dp), jnp.float32)            # [ r | z | n | I ]
        w_h = (w_h.at[:, 0:D].set(w_hr)
                  .at[:, Dp:Dp + D].set(w_hz)
                  .at[:, 2 * Dp:2 * Dp + D].set(w_hn)
                  .at[:, 3 * Dp:3 * Dp + D].set(jnp.eye(D, dtype=jnp.float32)))
        self.w_h = w_h

        b_i = jnp.zeros((1, 3 * Dp), jnp.float32)            # folded r/z biases
        b_i = (b_i.at[0, 0:D].set(b_ir + b_hr)
                  .at[0, Dp:Dp + D].set(b_iz + b_hz)
                  .at[0, 2 * Dp:2 * Dp + D].set(b_in))
        self.b_i = b_i
        self.b_hn = jnp.pad(b_hn[None, :], ((0, 0), (0, Dp - D)))  # [1, Dp]

    def _params(self):
        return (self.w_lin_s, self.w_lin_a, self.b_lin,
                self.w_i, self.w_h, self.b_i, self.b_hn)

    def forward(self, embedded_state, action, deterministic):
        # No jnp.concatenate: the Linear's K dim is pre-split across two dots.
        return recurrent_forward(embedded_state, action, deterministic,
                                 self._params())

    def input_init(self, batch_size):
        # TODO(synk): the reference's .cuda() device placement has no Pallas
        # analogue; JAX places the array on the default (TPU) backend.
        return jnp.zeros((batch_size, self.deterministic_size), jnp.float32)


# ---------------------------------------------------------------------------
# Pure-JAX reference (same math as PyTorch) for the correctness check
# ---------------------------------------------------------------------------
def reference_forward(m, embedded_state, action, deterministic):
    p = m._raw
    x = jnp.concatenate((embedded_state, action), axis=1)
    w_lin = jnp.concatenate((p['w_lin_s'], p['w_lin_a']), axis=0)
    pre = x @ w_lin + p['b_lin']
    a = jnp.where(pre > 0.0, pre, jnp.exp(jnp.minimum(pre, 0.0)) - 1.0)
    sig = lambda t: 1.0 / (1.0 + jnp.exp(-t))
    r = sig(a @ p['w_ir'] + p['b_ir'] + deterministic @ p['w_hr'] + p['b_hr'])
    z = sig(a @ p['w_iz'] + p['b_iz'] + deterministic @ p['w_hz'] + p['b_hz'])
    n = jnp.tanh(a @ p['w_in'] + p['b_in']
                 + r * (deterministic @ p['w_hn'] + p['b_hn']))
    return (1.0 - z) * n + z * deterministic


if __name__ == "__main__":
    action_size = 4
    stochastic_size = 8
    deterministic_size = 16
    hidden_size = 32
    batch = 10   # not a multiple of 8: exercises the full-batch single block

    key = jax.random.PRNGKey(0)
    k_param, k_emb, k_act, k_det = jax.random.split(key, 4)

    model = RecurrentModel(action_size, stochastic_size, deterministic_size,
                           hidden_size, k_param)

    embedded_state = jax.random.normal(k_emb, (batch, stochastic_size),
                                       jnp.float32)
    action = jax.random.normal(k_act, (batch, action_size), jnp.float32)
    deterministic = jax.random.normal(k_det, (batch, deterministic_size),
                                      jnp.float32)

    ref = reference_forward(model, embedded_state, action, deterministic)

    # Path 1: single grid step (whole batch in one block, no padding).
    h_new = model.forward(embedded_state, action, deterministic)
    h_new = jax.block_until_ready(h_new)
    assert h_new.shape == (batch, deterministic_size), h_new.shape
    assert bool(jnp.all(jnp.isfinite(h_new)))
    assert bool(jnp.allclose(h_new, ref, atol=1e-5, rtol=1e-5)), float(
        jnp.max(jnp.abs(h_new - ref)))

    # Path 2: tiled batch (grid > 1, padded last tile) — exercised with a
    # small tm_max so the multi-step "parallel" grid path is also validated.
    h_tiled = recurrent_forward(embedded_state, action, deterministic,
                                model._params(), tm_max=8)
    h_tiled = jax.block_until_ready(h_tiled)
    assert h_tiled.shape == (batch, deterministic_size), h_tiled.shape
    assert bool(jnp.allclose(h_tiled, ref, atol=1e-5, rtol=1e-5)), float(
        jnp.max(jnp.abs(h_tiled - ref)))

    print("KERNEL_OK")
</pallas_src>

<mosaic_0001>
module attributes {stable_mosaic.version = 11 : i64} {
  func.func @_recurrent_kernel(%arg0: i32, %arg1: memref<10x8xf32, #tpu.memory_space<vmem>>, %arg2: memref<10x4xf32, #tpu.memory_space<vmem>>, %arg3: memref<10x16xf32, #tpu.memory_space<vmem>>, %arg4: memref<8x128xf32, #tpu.memory_space<vmem>>, %arg5: memref<4x128xf32, #tpu.memory_space<vmem>>, %arg6: memref<1x128xf32, #tpu.memory_space<vmem>>, %arg7: memref<128x384xf32, #tpu.memory_space<vmem>>, %arg8: memref<16x512xf32, #tpu.memory_space<vmem>>, %arg9: memref<1x384xf32, #tpu.memory_space<vmem>>, %arg10: memref<1x128xf32, #tpu.memory_space<vmem>>, %arg11: memref<10x128xf32, #tpu.memory_space<vmem>>) attributes {dimension_semantics = [#tpu.dimension_semantics<parallel>], iteration_bounds = array<i64: 1>, scalar_prefetch = 0 : i64, scratch_operands = 0 : i64, tpu.core_type = #tpu.core_type<tc>, window_params = [{transform_indices = @transform_0, window_bounds = array<i64: 10, 8>}, {transform_indices = @transform_1, window_bounds = array<i64: 10, 4>}, {transform_indices = @transform_2, window_bounds = array<i64: 10, 16>}, {pipeline_mode = #tpu.pipeline_mode<synchronous>, transform_indices = @transform_3, window_bounds = array<i64: 8, 128>}, {pipeline_mode = #tpu.pipeline_mode<synchronous>, transform_indices = @transform_4, window_bounds = array<i64: 4, 128>}, {pipeline_mode = #tpu.pipeline_mode<synchronous>, transform_indices = @transform_5, window_bounds = array<i64: 1, 128>}, {pipeline_mode = #tpu.pipeline_mode<synchronous>, transform_indices = @transform_6, window_bounds = array<i64: 128, 384>}, {pipeline_mode = #tpu.pipeline_mode<synchronous>, transform_indices = @transform_7, window_bounds = array<i64: 16, 512>}, {pipeline_mode = #tpu.pipeline_mode<synchronous>, transform_indices = @transform_8, window_bounds = array<i64: 1, 384>}, {pipeline_mode = #tpu.pipeline_mode<synchronous>, transform_indices = @transform_9, window_bounds = array<i64: 1, 128>}, {transform_indices = @transform_10, window_bounds = array<i64: 10, 128>}]} {
    %c0 = arith.constant 0 : index
    %c0_0 = arith.constant 0 : index
    %0 = vector.load %arg1[%c0, %c0_0] : memref<10x8xf32, #tpu.memory_space<vmem>>, vector<10x8xf32>
    %c0_1 = arith.constant 0 : index
    %c0_2 = arith.constant 0 : index
    %1 = vector.load %arg4[%c0_1, %c0_2] : memref<8x128xf32, #tpu.memory_space<vmem>>, vector<8x128xf32>
    %cst = arith.constant dense<0.000000e+00> : vector<10x128xf32>
    %2 = tpu.matmul %0, %1, %cst {dimension_numbers = #tpu.dot_dimension_numbers<[1], [0], [0], [1], [0, 0, 1, 1], [], []>} : vector<10x8xf32>, vector<8x128xf32>, vector<10x128xf32> -> vector<10x128xf32>
    %c0_3 = arith.constant 0 : index
    %c0_4 = arith.constant 0 : index
    %3 = vector.load %arg2[%c0_3, %c0_4] : memref<10x4xf32, #tpu.memory_space<vmem>>, vector<10x4xf32>
    %c0_5 = arith.constant 0 : index
    %c0_6 = arith.constant 0 : index
    %4 = vector.load %arg5[%c0_5, %c0_6] : memref<4x128xf32, #tpu.memory_space<vmem>>, vector<4x128xf32>
    %cst_7 = arith.constant dense<0.000000e+00> : vector<10x128xf32>
    %5 = tpu.matmul %3, %4, %cst_7 {dimension_numbers = #tpu.dot_dimension_numbers<[1], [0], [0], [1], [0, 0, 1, 1], [], []>} : vector<10x4xf32>, vector<4x128xf32>, vector<10x128xf32> -> vector<10x128xf32>
    %6 = arith.addf %2, %5 : vector<10x128xf32>
    %c0_8 = arith.constant 0 : index
    %c0_9 = arith.constant 0 : index
    %7 = vector.load %arg6[%c0_8, %c0_9] : memref<1x128xf32, #tpu.memory_space<vmem>>, vector<1x128xf32>
    %8 = vector.broadcast %7 : vector<1x128xf32> to vector<10x128xf32>
    %9 = arith.addf %6, %8 : vector<10x128xf32>
    %cst_10 = arith.constant 0.000000e+00 : f32
    %10 = vector.broadcast %cst_10 : f32 to vector<10x128xf32>
    %11 = arith.cmpf ogt, %9, %10 : vector<10x128xf32>
    %cst_11 = arith.constant 0.000000e+00 : f32
    %12 = vector.broadcast %cst_11 : f32 to vector<10x128xf32>
    %13 = arith.minimumf %9, %12 : vector<10x128xf32>
    %14 = math.exp %13 : vector<10x128xf32>
    %cst_12 = arith.constant 1.000000e+00 : f32
    %15 = vector.broadcast %cst_12 : f32 to vector<10x128xf32>
    %16 = arith.subf %14, %15 : vector<10x128xf32>
    %17 = arith.select %11, %9, %16 : vector<10x128xi1>, vector<10x128xf32>
    %c0_13 = arith.constant 0 : index
    %c0_14 = arith.constant 0 : index
    %18 = vector.load %arg7[%c0_13, %c0_14] : memref<128x384xf32, #tpu.memory_space<vmem>>, vector<128x384xf32>
    %cst_15 = arith.constant dense<0.000000e+00> : vector<10x384xf32>
    %19 = tpu.matmul %17, %18, %cst_15 {dimension_numbers = #tpu.dot_dimension_numbers<[1], [0], [0], [1], [0, 0, 1, 1], [], []>} : vector<10x128xf32>, vector<128x384xf32>, vector<10x384xf32> -> vector<10x384xf32>
    %c0_16 = arith.constant 0 : index
    %c0_17 = arith.constant 0 : index
    %20 = vector.load %arg9[%c0_16, %c0_17] : memref<1x384xf32, #tpu.memory_space<vmem>>, vector<1x384xf32>
    %21 = vector.broadcast %20 : vector<1x384xf32> to vector<10x384xf32>
    %22 = arith.addf %19, %21 : vector<10x384xf32>
    %c0_18 = arith.constant 0 : index
    %c0_19 = arith.constant 0 : index
    %23 = vector.load %arg3[%c0_18, %c0_19] : memref<10x16xf32, #tpu.memory_space<vmem>>, vector<10x16xf32>
    %c0_20 = arith.constant 0 : index
    %c0_21 = arith.constant 0 : index
    %24 = vector.load %arg8[%c0_20, %c0_21] : memref<16x512xf32, #tpu.memory_space<vmem>>, vector<16x512xf32>
    %cst_22 = arith.constant dense<0.000000e+00> : vector<10x512xf32>
    %25 = tpu.matmul %23, %24, %cst_22 {dimension_numbers = #tpu.dot_dimension_numbers<[1], [0], [0], [1], [0, 0, 1, 1], [], []>} : vector<10x16xf32>, vector<16x512xf32>, vector<10x512xf32> -> vector<10x512xf32>
    %26 = vector.extract_strided_slice %22 {offsets = [0, 0], sizes = [10, 128], strides = [1, 1]} : vector<10x384xf32> to vector<10x128xf32>
    %27 = vector.extract_strided_slice %25 {offsets = [0, 0], sizes = [10, 128], strides = [1, 1]} : vector<10x512xf32> to vector<10x128xf32>
    %28 = arith.addf %26, %27 : vector<10x128xf32>
    %cst_23 = arith.constant 0.000000e+00 : f32
    %29 = vector.broadcast %cst_23 : f32 to vector<10x128xf32>
    %30 = arith.subf %29, %28 : vector<10x128xf32>
    %31 = math.exp %30 : vector<10x128xf32>
    %cst_24 = arith.constant 1.000000e+00 : f32
    %32 = vector.broadcast %cst_24 : f32 to vector<10x128xf32>
    %33 = arith.addf %32, %31 : vector<10x128xf32>
    %cst_25 = arith.constant 1.000000e+00 : f32
    %34 = vector.broadcast %cst_25 : f32 to vector<10x128xf32>
    %35 = arith.divf %34, %33 : vector<10x128xf32>
    %36 = vector.extract_strided_slice %22 {offsets = [0, 128], sizes = [10, 128], strides = [1, 1]} : vector<10x384xf32> to vector<10x128xf32>
    %37 = vector.extract_strided_slice %25 {offsets = [0, 128], sizes = [10, 128], strides = [1, 1]} : vector<10x512xf32> to vector<10x128xf32>
    %38 = arith.addf %36, %37 : vector<10x128xf32>
    %cst_26 = arith.constant 0.000000e+00 : f32
    %39 = vector.broadcast %cst_26 : f32 to vector<10x128xf32>
    %40 = arith.subf %39, %38 : vector<10x128xf32>
    %41 = math.exp %40 : vector<10x128xf32>
    %cst_27 = arith.constant 1.000000e+00 : f32
    %42 = vector.broadcast %cst_27 : f32 to vector<10x128xf32>
    %43 = arith.addf %42, %41 : vector<10x128xf32>
    %cst_28 = arith.constant 1.000000e+00 : f32
    %44 = vector.broadcast %cst_28 : f32 to vector<10x128xf32>
    %45 = arith.divf %44, %43 : vector<10x128xf32>
    %46 = vector.extract_strided_slice %22 {offsets = [0, 256], sizes = [10, 128], strides = [1, 1]} : vector<10x384xf32> to vector<10x128xf32>
    %47 = vector.extract_strided_slice %25 {offsets = [0, 256], sizes = [10, 128], strides = [1, 1]} : vector<10x512xf32> to vector<10x128xf32>
    %c0_29 = arith.constant 0 : index
    %c0_30 = arith.constant 0 : index
    %48 = vector.load %arg10[%c0_29, %c0_30] : memref<1x128xf32, #tpu.memory_space<vmem>>, vector<1x128xf32>
    %49 = vector.broadcast %48 : vector<1x128xf32> to vector<10x128xf32>
    %50 = arith.addf %47, %49 : vector<10x128xf32>
    %51 = arith.mulf %35, %50 : vector<10x128xf32>
    %52 = arith.addf %46, %51 : vector<10x128xf32>
    %53 = math.tanh %52 : vector<10x128xf32>
    %54 = vector.extract_strided_slice %25 {offsets = [0, 384], sizes = [10, 128], strides = [1, 1]} : vector<10x512xf32> to vector<10x128xf32>
    %cst_31 = arith.constant 1.000000e+00 : f32
    %55 = vector.broadcast %cst_31 : f32 to vector<10x128xf32>
    %56 = arith.subf %55, %45 : vector<10x128xf32>
    %57 = arith.mulf %56, %53 : vector<10x128xf32>
    %58 = arith.mulf %45, %54 : vector<10x128xf32>
    %59 = arith.addf %57, %58 : vector<10x128xf32>
    %c0_32 = arith.constant 0 : index
    %c0_33 = arith.constant 0 : index
    %60 = vector.load %arg11[%c0_32, %c0_33] : memref<10x128xf32, #tpu.memory_space<vmem>>, vector<10x128xf32>
    tpu.vector_store %arg11[%c0_32, %c0_33], %59 {strides = array<i32>} : memref<10x128xf32, #tpu.memory_space<vmem>>, vector<10x128xf32>,
    return
  }
  func.func @transform_0(%arg0: i32) -> (i32, i32) {
    %c0_i32 = arith.constant 0 : i32
    %c0_i32_0 = arith.constant 0 : i32
    return %arg0, %c0_i32 : i32, i32
  }
  func.func @transform_1(%arg0: i32) -> (i32, i32) {
    %c0_i32 = arith.constant 0 : i32
    %c0_i32_0 = arith.constant 0 : i32
    return %arg0, %c0_i32 : i32, i32
  }
  func.func @transform_2(%arg0: i32) -> (i32, i32) {
    %c0_i32 = arith.constant 0 : i32
    %c0_i32_0 = arith.constant 0 : i32
    return %arg0, %c0_i32 : i32, i32
  }
  func.func @transform_3(%arg0: i32) -> (i32, i32) {
    %c0_i32 = arith.constant 0 : i32
    %c0_i32_0 = arith.constant 0 : i32
    %c0_i32_1 = arith.constant 0 : i32
    return %c0_i32, %c0_i32_0 : i32, i32
  }
  func.func @transform_4(%arg0: i32) -> (i32, i32) {
    %c0_i32 = arith.constant 0 : i32
    %c0_i32_0 = arith.constant 0 : i32
    %c0_i32_1 = arith.constant 0 : i32
    return %c0_i32, %c0_i32_0 : i32, i32
  }
  func.func @transform_5(%arg0: i32) -> (i32, i32) {
    %c0_i32 = arith.constant 0 : i32
    %c0_i32_0 = arith.constant 0 : i32
    %c0_i32_1 = arith.constant 0 : i32
    return %c0_i32, %c0_i32_0 : i32, i32
  }
  func.func @transform_6(%arg0: i32) -> (i32, i32) {
    %c0_i32 = arith.constant 0 : i32
    %c0_i32_0 = arith.constant 0 : i32
    %c0_i32_1 = arith.constant 0 : i32
    return %c0_i32, %c0_i32_0 : i32, i32
  }
  func.func @transform_7(%arg0: i32) -> (i32, i32) {
    %c0_i32 = arith.constant 0 : i32
    %c0_i32_0 = arith.constant 0 : i32
    %c0_i32_1 = arith.constant 0 : i32
    return %c0_i32, %c0_i32_0 : i32, i32
  }
  func.func @transform_8(%arg0: i32) -> (i32, i32) {
    %c0_i32 = arith.constant 0 : i32
    %c0_i32_0 = arith.constant 0 : i32
    %c0_i32_1 = arith.constant 0 : i32
    return %c0_i32, %c0_i32_0 : i32, i32
  }
  func.func @transform_9(%arg0: i32) -> (i32, i32) {
    %c0_i32 = arith.constant 0 : i32
    %c0_i32_0 = arith.constant 0 : i32
    %c0_i32_1 = arith.constant 0 : i32
    return %c0_i32, %c0_i32_0 : i32, i32
  }
  func.func @transform_10(%arg0: i32) -> (i32, i32) {
    %c0_i32 = arith.constant 0 : i32
    %c0_i32_0 = arith.constant 0 : i32
    return %arg0, %c0_i32 : i32, i32
  }
}

</mosaic_0001>

<llo_original>
// kernel: tpu_custom_call.1
$region0: #{tpu_custom_call.1}
  #allocation0 [shape = 'u32[]', space=smem, size = 0x4, offset = 0x4, fixed_abs, tag = 'smem constant byte address 0x4 - core index']
  #allocation1 [shape = 'u32[144,128]{1,0:T(1,128)}', space=vmem, size = 0x12000, scoped, tag = 'internal scratch']
  %s0 = inlined_call_operand.vmem [shape: f32[10,8], index: 0, kind: input, shape index: {}]
  %s1 = inlined_call_operand.vmem [shape: f32[10,4], index: 1, kind: input, shape index: {}]
  %s2 = inlined_call_operand.hbm [shape: f32[10,16], index: 2, kind: input, shape index: {}]
  %s3 = inlined_call_operand.hbm [shape: f32[8,128], index: 3, kind: input, shape index: {}]
  %s4 = inlined_call_operand.vmem [shape: f32[4,128], index: 4, kind: input, shape index: {}]
  %s5 = inlined_call_operand.vmem [shape: f32[1,128], index: 5, kind: input, shape index: {}]
  %s6 = inlined_call_operand.hbm [shape: f32[128,384], index: 6, kind: input, shape index: {}]
  %s7 = inlined_call_operand.vmem [shape: f32[16,512], index: 7, kind: input, shape index: {}]
  %s8 = inlined_call_operand.vmem [shape: f32[1,384], index: 8, kind: input, shape index: {}]
  %s9 = inlined_call_operand.vmem [shape: f32[1,128], index: 9, kind: input, shape index: {}]
  %s10 = inlined_call_operand.hbm [shape: f32[10,128], index: 10, kind: output, shape index: {}]
  %s11 = sld [smem:[#allocation0]]
  $region62: #{tpu_custom_call.1} parent=0
    _
  %s13 = ssub.s32 1, %s11
  %s14 = scalar_select 0, %s13, %s11
  $region1: #{tpu_custom_call.1} parent=0
    #allocation2 [shape = 'u8[8192]{0}', space=vmem, size = 0x2000, scoped, tag = 'input window, operand 2, single buffered']
    #allocation3 [shape = 's32[1]{0}', space=sflag, size = 0x4, scoped, tag = 'scoped memory for tpu_custom_call.1']
    #allocation4 [shape = 's32[1]{0}', space=sflag, size = 0x4, scoped, tag = 'scoped memory for tpu_custom_call.1']
    #allocation5 [shape = 'u8[4096]{0}', space=vmem, size = 0x1000, scoped, tag = 'input window, operand 3, single buffered']
    #allocation6 [shape = 's32[1]{0}', space=sflag, size = 0x4, scoped, tag = 'scoped memory for tpu_custom_call.1']
    #allocation7 [shape = 'u8[196608]{0}', space=vmem, size = 0x30000, scoped, tag = 'input window, operand 6, single buffered']
    #allocation8 [shape = 'u8[8192]{0}', space=vmem, size = 0x2000, scoped, tag = 'output window, operand 0, single buffered']
    %15 = vsyncpa [#allocation3], 0
    %16 = vsyncpa [#allocation6], 0
    %17 = vsyncpa [#allocation4], 0
    // Predicated region
    $region2: #{tpu_custom_call.1} parent=1 // pred_check
      _
    $region3: #{tpu_custom_call.1} parent=1 // pred_check_branch
      %19 = sbr.rel (0) target = $region5
    $region4: #{tpu_custom_call.1} parent=1 // pred_region
      _
    $region5: #{tpu_custom_call.1} parent=1 // pred_fallthru
      _
    // Predicated region
    $region6: #{tpu_custom_call.1} parent=1 // pred_check
      _
    $region7: #{tpu_custom_call.1} parent=1 // pred_check_branch
      %21 = sbr.rel (0) target = $region9
    $region8: #{tpu_custom_call.1} parent=1 // pred_region
      _
    $region9: #{tpu_custom_call.1} parent=1 // pred_fallthru
      _
    // Predicated region
    $region10: #{tpu_custom_call.1} parent=1 // pred_check
      _
    $region11: #{tpu_custom_call.1} parent=1 // pred_check_branch
      %23 = sbr.rel (0) target = $region13
    $region12: #{tpu_custom_call.1} parent=1 // pred_region
      %s25 = ssub.s32 256, 256
      %26 = vsyncadd [#allocation3], %s25
      %s27 = sshll.u32 [#allocation2], 4
      %s28 = int_to_ptr.vmem [resolvable:$true] %s27
      %33 = dma.hbm_to_vmem [thread:$0]  %s2, 256, %s28, [#allocation3], 128, 128, 8
    $region13: #{tpu_custom_call.1} parent=1 // pred_fallthru
      _
    // Predicated region
    $region14: #{tpu_custom_call.1} parent=1 // pred_check
      _
    $region15: #{tpu_custom_call.1} parent=1 // pred_check_branch
      %35 = sbr.rel (0) target = $region17
    $region16: #{tpu_custom_call.1} parent=1 // pred_region
      %s37 = ssub.s32 128, 128
      %38 = vsyncadd [#allocation6], %s37
      %s40 = sshll.u32 [#allocation5], 4
      %s41 = int_to_ptr.vmem [resolvable:$true] %s40
      %43 = dma.hbm_to_vmem [thread:$0]  %s3, 128, %s41, [#allocation6]
    $region17: #{tpu_custom_call.1} parent=1 // pred_fallthru
      _
    // Predicated region
    $region18: #{tpu_custom_call.1} parent=1 // pred_check
      _
    $region19: #{tpu_custom_call.1} parent=1 // pred_check_branch
      %45 = sbr.rel (0) target = $region21
    $region20: #{tpu_custom_call.1} parent=1 // pred_region
      _
    $region21: #{tpu_custom_call.1} parent=1 // pred_fallthru
      _
    // Predicated region
    $region22: #{tpu_custom_call.1} parent=1 // pred_check
      _
    $region23: #{tpu_custom_call.1} parent=1 // pred_check_branch
      %47 = sbr.rel (0) target = $region25
    $region24: #{tpu_custom_call.1} parent=1 // pred_region
      _
    $region25: #{tpu_custom_call.1} parent=1 // pred_fallthru
      _
    // Predicated region
    $region26: #{tpu_custom_call.1} parent=1 // pred_check
      _
    $region27: #{tpu_custom_call.1} parent=1 // pred_check_branch
      %49 = sbr.rel (0) target = $region29
    $region28: #{tpu_custom_call.1} parent=1 // pred_region
      %s51 = ssub.s32 6144, 6144
      %52 = vsyncadd [#allocation6], %s51
      %s53 = sshll.u32 [#allocation7], 4
      %s54 = int_to_ptr.vmem [resolvable:$true] %s53
      %59 = dma.hbm_to_vmem [thread:$0]  %s6, 6144, %s54, [#allocation6], 384, 384, 24
    $region29: #{tpu_custom_call.1} parent=1 // pred_fallthru
      _
    // Predicated region
    $region30: #{tpu_custom_call.1} parent=1 // pred_check
      _
    $region31: #{tpu_custom_call.1} parent=1 // pred_check_branch
      %61 = sbr.rel (0) target = $region33
    $region32: #{tpu_custom_call.1} parent=1 // pred_region
      _
    $region33: #{tpu_custom_call.1} parent=1 // pred_fallthru
      _
    // Predicated region
    $region34: #{tpu_custom_call.1} parent=1 // pred_check
      _
    $region35: #{tpu_custom_call.1} parent=1 // pred_check_branch
      %63 = sbr.rel (0) target = $region37
    $region36: #{tpu_custom_call.1} parent=1 // pred_region
      _
    $region37: #{tpu_custom_call.1} parent=1 // pred_fallthru
      _
    // Predicated region
    $region38: #{tpu_custom_call.1} parent=1 // pred_check
      _
    $region39: #{tpu_custom_call.1} parent=1 // pred_check_branch
      %65 = sbr.rel (0) target = $region41
    $region40: #{tpu_custom_call.1} parent=1 // pred_region
      _
    $region41: #{tpu_custom_call.1} parent=1 // pred_fallthru
      _
    // Predicated region
    $region42: #{tpu_custom_call.1} parent=1 // pred_check
      _
    $region43: #{tpu_custom_call.1} parent=1 // pred_check_branch
      %67 = sbr.rel (0) target = $region45
    $region44: #{tpu_custom_call.1} parent=1 // pred_region
      %68 = dma.done [#allocation3], 256
    $region45: #{tpu_custom_call.1} parent=1 // pred_fallthru
      _
    // Predicated region
    $region46: #{tpu_custom_call.1} parent=1 // pred_check
      _
    $region47: #{tpu_custom_call.1} parent=1 // pred_check_branch
      %70 = sbr.rel (0) target = $region49
    $region48: #{tpu_custom_call.1} parent=1 // pred_region
      %71 = dma.done [#allocation6], 128
    $region49: #{tpu_custom_call.1} parent=1 // pred_fallthru
      _
    // Predicated region
    $region50: #{tpu_custom_call.1} parent=1 // pred_check
      _
    $region51: #{tpu_custom_call.1} parent=1 // pred_check_branch
      %73 = sbr.rel (0) target = $region53
    $region52: #{tpu_custom_call.1} parent=1 // pred_region
      %74 = dma.done [#allocation6], 6144
    $region53: #{tpu_custom_call.1} parent=1 // pred_fallthru
      _
    %v75 = vld [vmem:[%s0] sm:$0xff]
    %v76 = vld [vmem:[%s0 + $0x8] sm:$0x3]
    %v77 = vld [vmem:[#allocation5] sm:$0xff]
    %v78 = vld [vmem:[%s1] sm:$0xff]
    %v79 = vld [vmem:[%s1 + $0x8] sm:$0x3]
    %v80 = vld [vmem:[%s4] sm:$0xf]
    %vm81 = vcmask 31744
    %v83 = vsel %vm81, %v78, 0
    %v86 = vsel %vm81, %v79, 0
    %vm88 = vcmask 1043456
    %v90 = vsel %vm88, %v80, 0
    %92 = vmatprep.subr.mxu0 0.0
    %93 = vmatpush1.msra.mxu0 %v90
    %94 = vmatprep.subr.mxu0 0.0
    %95 = vmatpush1.msra.mxu0 0.0
    %96 = vmatprep.subr.mxu0 0.0
    %97 = vmatpush1.msra.mxu0 0.0
    %98 = vmatprep.subr.mxu0 0.0
    %99 = vmatpush1.msra.mxu0 0.0
    %100 = vmatprep.subr.mxu0 0.0
    %101 = vmatpush1.msra.mxu0 0.0
    %102 = vmatprep.subr.mxu0 0.0
    %103 = vmatpush1.msra.mxu0 0.0
    %104 = vmatprep.subr.mxu0 0.0
    %105 = vmatpush1.msra.mxu0 0.0
    %106 = vmatprep.subr.mxu0 0.0
    %107 = vmatpush1.msra.mxu0 0.0
    %108 = vmatprep.subr.mxu0 0.0
    %109 = vmatpush1.msra.mxu0 0.0
    %110 = vmatprep.subr.mxu0 0.0
    %111 = vmatpush1.msra.mxu0 0.0
    %112 = vmatprep.subr.mxu0 0.0
    %113 = vmatpush1.msra.mxu0 0.0
    %114 = vmatprep.subr.mxu0 0.0
    %115 = vmatpush1.msra.mxu0 0.0
    %116 = vmatprep.subr.mxu0 0.0
    %117 = vmatpush1.msra.mxu0 0.0
    %118 = vmatprep.subr.mxu0 0.0
    %119 = vmatpush1.msra.mxu0 0.0
    %120 = vmatprep.subr.mxu0 0.0
    %121 = vmatpush1.msra.mxu0 0.0
    %122 = vmatprep.subr.mxu0 0.0
    %123 = vmatpush1.msra.mxu0 0.0
    %124 = vmatprep.subr.mxu0 0.0
    %125 = vmatpush1.msra.mxu0 0.0
    %126 = vmatprep.subr.mxu0 0.0
    %127 = vmatpush1.msra.mxu0 0.0
    %128 = vmatprep.subr.mxu0 0.0
    %129 = vmatpush1.msra.mxu0 0.0
    %130 = vmatprep.subr.mxu0 0.0
    %131 = vmatpush1.msra.mxu0 0.0
    %132 = vmatprep.subr.mxu0 0.0
    %133 = vmatpush1.msra.mxu0 0.0
    %134 = vmatprep.subr.mxu0 0.0
    %135 = vmatpush1.msra.mxu0 0.0
    %136 = vmatprep.subr.mxu0 0.0
    %137 = vmatpush1.msra.mxu0 0.0
    %138 = vmatprep.subr.mxu0 0.0
    %139 = vmatpush1.msra.mxu0 0.0
    %140 = vmatprep.subr.mxu0 0.0
    %141 = vmatpush1.msra.mxu0 0.0
    %142 = vmatprep.subr.mxu0 0.0
    %143 = vmatpush1.msra.mxu0 0.0
    %144 = vmatprep.subr.mxu0 0.0
    %145 = vmatpush1.msra.mxu0 0.0
    %146 = vmatprep.subr.mxu0 0.0
    %147 = vmatpush1.msra.mxu0 0.0
    %148 = vmatprep.subr.mxu0 0.0
    %149 = vmatpush1.msra.mxu0 0.0
    %150 = vmatprep.subr.mxu0 0.0
    %151 = vmatpush1.msra.mxu0 0.0
    %152 = vmatprep.subr.mxu0 0.0
    %153 = vmatpush1.msra.mxu0 0.0
    %154 = vmatprep.subr.mxu0 0.0
    %155 = vmatpush1.msra.mxu0 0.0
    %156 = vmatprep.mubr.f32.mxu0 0.0
    %157 = vmatmul.mubr.f32.gmra.mrb[0].mxu0 %v83
    %v158 = vpop.f32.mrb[0].mxu0
    %v159 = vadd.f32 0.0, %v158
    %v160 = vpop.f32.mrb[0].mxu0
    %161 = vmatprep.mubr.f32.mxu0 0.0
    %162 = vmatmul.mubr.f32.gmra.mrb[0].mxu0 %v86
    %v163 = vpop.f32.mrb[0].mxu0
    %v164 = vadd.f32 0.0, %v163
    %v165 = vpop.f32.mrb[0].mxu0
    %166 = vdwg.mxu0
    %vm167 = vcmask 64512
    %v169 = vsel %vm167, %v75, 0
    %v172 = vsel %vm167, %v76, 0
    %174 = vmatprep.subr.mxu0 0.0
    %175 = vmatpush1.msra.mxu0 %v77
    %176 = vmatprep.subr.mxu0 0.0
    %177 = vmatpush1.msra.mxu0 0.0
    %178 = vmatprep.subr.mxu0 0.0
    %179 = vmatpush1.msra.mxu0 0.0
    %180 = vmatprep.subr.mxu0 0.0
    %181 = vmatpush1.msra.mxu0 0.0
    %182 = vmatprep.subr.mxu0 0.0
    %183 = vmatpush1.msra.mxu0 0.0
    %184 = vmatprep.subr.mxu0 0.0
    %185 = vmatpush1.msra.mxu0 0.0
    %186 = vmatprep.subr.mxu0 0.0
    %187 = vmatpush1.msra.mxu0 0.0
    %188 = vmatprep.subr.mxu0 0.0
    %189 = vmatpush1.msra.mxu0 0.0
    %190 = vmatprep.subr.mxu0 0.0
    %191 = vmatpush1.msra.mxu0 0.0
    %192 = vmatprep.subr.mxu0 0.0
    %193 = vmatpush1.msra.mxu0 0.0
    %194 = vmatprep.subr.mxu0 0.0
    %195 = vmatpush1.msra.mxu0 0.0
    %196 = vmatprep.subr.mxu0 0.0
    %197 = vmatpush1.msra.mxu0 0.0
    %198 = vmatprep.subr.mxu0 0.0
    %199 = vmatpush1.msra.mxu0 0.0
    %200 = vmatprep.subr.mxu0 0.0
    %201 = vmatpush1.msra.mxu0 0.0
    %202 = vmatprep.subr.mxu0 0.0
    %203 = vmatpush1.msra.mxu0 0.0
    %204 = vmatprep.subr.mxu0 0.0
    %205 = vmatpush1.msra.mxu0 0.0
    %206 = vmatprep.subr.mxu0 0.0
    %207 = vmatpush1.msra.mxu0 0.0
    %208 = vmatprep.subr.mxu0 0.0
    %209 = vmatpush1.msra.mxu0 0.0
    %210 = vmatprep.subr.mxu0 0.0
    %211 = vmatpush1.msra.mxu0 0.0
    %212 = vmatprep.subr.mxu0 0.0
    %213 = vmatpush1.msra.mxu0 0.0
    %214 = vmatprep.subr.mxu0 0.0
    %215 = vmatpush1.msra.mxu0 0.0
    %216 = vmatprep.subr.mxu0 0.0
    %217 = vmatpush1.msra.mxu0 0.0
    %218 = vmatprep.subr.mxu0 0.0
    %219 = vmatpush1.msra.mxu0 0.0
    %220 = vmatprep.subr.mxu0 0.0
    %221 = vmatpush1.msra.mxu0 0.0
    %222 = vmatprep.subr.mxu0 0.0
    %223 = vmatpush1.msra.mxu0 0.0
    %224 = vmatprep.subr.mxu0 0.0
    %225 = vmatpush1.msra.mxu0 0.0
    %226 = vmatprep.subr.mxu0 0.0
    %227 = vmatpush1.msra.mxu0 0.0
    %228 = vmatprep.subr.mxu0 0.0
    %229 = vmatpush1.msra.mxu0 0.0
    %230 = vmatprep.subr.mxu0 0.0
    %231 = vmatpush1.msra.mxu0 0.0
    %232 = vmatprep.subr.mxu0 0.0
    %233 = vmatpush1.msra.mxu0 0.0
    %234 = vmatprep.subr.mxu0 0.0
    %235 = vmatpush1.msra.mxu0 0.0
    %236 = vmatprep.subr.mxu0 0.0
    %237 = vmatpush1.msra.mxu0 0.0
    %238 = vmatprep.mubr.f32.mxu0 0.0
    %239 = vmatmul.mubr.f32.gmra.mrb[0].mxu0 %v169
    %v240 = vpop.f32.mrb[0].mxu0
    %v241 = vadd.f32 %v159, %v240
    %v242 = vpop.f32.mrb[0].mxu0
    %243 = vmatprep.mubr.f32.mxu0 0.0
    %244 = vmatmul.mubr.f32.gmra.mrb[0].mxu0 %v172
    %v245 = vpop.f32.mrb[0].mxu0
    %v246 = vadd.f32 %v164, %v245
    %v247 = vpop.f32.mrb[0].mxu0
    %248 = vdwg.mxu0
    %v249 = vld [vmem:[%s5] sm:$0x1]
    %v251 = vlaneseq
    %v252 = vshrl.u32 %v251, 7
    %v253 = vsub.s32 0, %v252
    %v254 = vrot.slane %v249, %v253
    %v256 = vadd.f32 %v241, %v254
    %v257 = vadd.f32 %v246, %v254
    %vm258 = vcmp.gt.f32.partialorder %v256, 0.0
    %vm259 = vcmp.gt.f32.partialorder %v257, 0.0
    %v260 = vmin.f32 %v256, 0.0
    %v261 = vmin.f32 %v257, 0.0
    %v262 = vmul.f32 %v260, 1.442695
    %v263 = vpow.pop %v262
    %v264 = vmul.f32 %v261, 1.442695
    %v265 = vpow.pop %v264
    %v266 = vsub.f32 %v263, 1.0
    %v267 = vsub.f32 %v265, 1.0
    %v268 = vsel %vm258, %v256, %v266
    %v269 = vsel %vm259, %v257, %v267
    %v270 = vld [vmem:[#allocation7] sm:$0xff]
    %v271 = vld [vmem:[#allocation7 + $0x8] sm:$0xff]
    %v272 = vld [vmem:[#allocation7 + $0x10] sm:$0xff]
    %v273 = vld [vmem:[#allocation7 + $0x18] sm:$0xff]
    %v274 = vld [vmem:[#allocation7 + $0x20] sm:$0xff]
    %v275 = vld [vmem:[#allocation7 + $0x28] sm:$0xff]
    %v276 = vld [vmem:[#allocation7 + $0x30] sm:$0xff]
    %v277 = vld [vmem:[#allocation7 + $0x38] sm:$0xff]
    %v278 = vld [vmem:[#allocation7 + $0x40] sm:$0xff]
    %v279 = vld [vmem:[#allocation7 + $0x48] sm:$0xff]
    %v280 = vld [vmem:[#allocation7 + $0x50] sm:$0xff]
    %v281 = vld [vmem:[#allocation7 + $0x58] sm:$0xff]
    %v282 = vld [vmem:[#allocation7 + $0x60] sm:$0xff]
    %v283 = vld [vmem:[#allocation7 + $0x68] sm:$0xff]
    %v284 = vld [vmem:[#allocation7 + $0x70] sm:$0xff]
    %v285 = vld [vmem:[#allocation7 + $0x78] sm:$0xff]
    %v286 = vld [vmem:[#allocation7 + $0x80] sm:$0xff]
    %v287 = vld [vmem:[#allocation7 + $0x88] sm:$0xff]
    %v288 = vld [vmem:[#allocation7 + $0x90] sm:$0xff]
    %v289 = vld [vmem:[#allocation7 + $0x98] sm:$0xff]
    %v290 = vld [vmem:[#allocation7 + $0xa0] sm:$0xff]
    %v291 = vld [vmem:[#allocation7 + $0xa8] sm:$0xff]
    %v292 = vld [vmem:[#allocation7 + $0xb0] sm:$0xff]
    %v293 = vld [vmem:[#allocation7 + $0xb8] sm:$0xff]
    %v294 = vld [vmem:[#allocation7 + $0xc0] sm:$0xff]
    %v295 = vld [vmem:[#allocation7 + $0xc8] sm:$0xff]
    %v296 = vld [vmem:[#allocation7 + $0xd0] sm:$0xff]
    %v297 = vld [vmem:[#allocation7 + $0xd8] sm:$0xff]
    %v298 = vld [vmem:[#allocation7 + $0xe0] sm:$0xff]
    %v299 = vld [vmem:[#allocation7 + $0xe8] sm:$0xff]
    %v300 = vld [vmem:[#allocation7 + $0xf0] sm:$0xff]
    %v301 = vld [vmem:[#allocation7 + $0xf8] sm:$0xff]
    %v302 = vld [vmem:[#allocation7 + $0x100] sm:$0xff]
    %v303 = vld [vmem:[#allocation7 + $0x108] sm:$0xff]
    %v304 = vld [vmem:[#allocation7 + $0x110] sm:$0xff]
    %v305 = vld [vmem:[#allocation7 + $0x118] sm:$0xff]
    %v306 = vld [vmem:[#allocation7 + $0x120] sm:$0xff]
    %v307 = vld [vmem:[#allocation7 + $0x128] sm:$0xff]
    %v308 = vld [vmem:[#allocation7 + $0x130] sm:$0xff]
    %v309 = vld [vmem:[#allocation7 + $0x138] sm:$0xff]
    %v310 = vld [vmem:[#allocation7 + $0x140] sm:$0xff]
    %v311 = vld [vmem:[#allocation7 + $0x148] sm:$0xff]
    %v312 = vld [vmem:[#allocation7 + $0x150] sm:$0xff]
    %v313 = vld [vmem:[#allocation7 + $0x158] sm:$0xff]
    %v314 = vld [vmem:[#allocation7 + $0x160] sm:$0xff]
    %v315 = vld [vmem:[#allocation7 + $0x168] sm:$0xff]
    %v316 = vld [vmem:[#allocation7 + $0x170] sm:$0xff]
    %v317 = vld [vmem:[#allocation7 + $0x178] sm:$0xff]
    %v318 = vld [vmem:[%s8] sm:$0x7]
    %v320 = vlaneseq
    %v321 = vshrl.u32 %v320, 7
    %v322 = vsub.s32 0, %v321
    %v323 = vrot.slane %v318, %v322
    %v324 = vlaneseq
    %v325 = vshrl.u32 %v324, 7
    %v326 = vsub.s32 1, %v325
    %v327 = vrot.slane %v318, %v326
    %v328 = vlaneseq
    %v329 = vshrl.u32 %v328, 7
    %v330 = vsub.s32 2, %v329
    %v331 = vrot.slane %v318, %v330
    %335 = vmatprep.subr.mxu0 %v271
    %336 = vmatpush1.msra.mxu0 %v270
    %337 = vmatprep.subr.mxu0 %v274
    %338 = vmatpush1.msra.mxu0 %v273
    %339 = vmatprep.subr.mxu0 %v277
    %340 = vmatpush1.msra.mxu0 %v276
    %341 = vmatprep.subr.mxu0 %v280
    %342 = vmatpush1.msra.mxu0 %v279
    %343 = vmatprep.subr.mxu0 %v283
    %344 = vmatpush1.msra.mxu0 %v282
    %345 = vmatprep.subr.mxu0 %v286
    %346 = vmatpush1.msra.mxu0 %v285
    %347 = vmatprep.subr.mxu0 %v289
    %348 = vmatpush1.msra.mxu0 %v288
    %349 = vmatprep.subr.mxu0 %v292
    %350 = vmatpush1.msra.mxu0 %v291
    %351 = vmatprep.subr.mxu0 %v295
    %352 = vmatpush1.msra.mxu0 %v294
    %353 = vmatprep.subr.mxu0 %v298
    %354 = vmatpush1.msra.mxu0 %v297
    %355 = vmatprep.subr.mxu0 %v301
    %356 = vmatpush1.msra.mxu0 %v300
    %357 = vmatprep.subr.mxu0 %v304
    %358 = vmatpush1.msra.mxu0 %v303
    %359 = vmatprep.subr.mxu0 %v307
    %360 = vmatpush1.msra.mxu0 %v306
    %361 = vmatprep.subr.mxu0 %v310
    %362 = vmatpush1.msra.mxu0 %v309
    %363 = vmatprep.subr.mxu0 %v313
    %364 = vmatpush1.msra.mxu0 %v312
    %365 = vmatprep.subr.mxu0 %v316
    %366 = vmatpush1.msra.mxu0 %v315
    %367 = vmatprep.subr.mxu0 0.0
    %368 = vmatpush1.msra.mxu0 0.0
    %369 = vmatprep.subr.mxu0 0.0
    %370 = vmatpush1.msra.mxu0 0.0
    %371 = vmatprep.subr.mxu0 0.0
    %372 = vmatpush1.msra.mxu0 0.0
    %373 = vmatprep.subr.mxu0 0.0
    %374 = vmatpush1.msra.mxu0 0.0
    %375 = vmatprep.subr.mxu0 0.0
    %376 = vmatpush1.msra.mxu0 0.0
    %377 = vmatprep.subr.mxu0 0.0
    %378 = vmatpush1.msra.mxu0 0.0
    %379 = vmatprep.subr.mxu0 0.0
    %380 = vmatpush1.msra.mxu0 0.0
    %381 = vmatprep.subr.mxu0 0.0
    %382 = vmatpush1.msra.mxu0 0.0
    %383 = vmatprep.subr.mxu0 0.0
    %384 = vmatpush1.msra.mxu0 0.0
    %385 = vmatprep.subr.mxu0 0.0
    %386 = vmatpush1.msra.mxu0 0.0
    %387 = vmatprep.subr.mxu0 0.0
    %388 = vmatpush1.msra.mxu0 0.0
    %389 = vmatprep.subr.mxu0 0.0
    %390 = vmatpush1.msra.mxu0 0.0
    %391 = vmatprep.subr.mxu0 0.0
    %392 = vmatpush1.msra.mxu0 0.0
    %393 = vmatprep.subr.mxu0 0.0
    %394 = vmatpush1.msra.mxu0 0.0
    %395 = vmatprep.subr.mxu0 0.0
    %396 = vmatpush1.msra.mxu0 0.0
    %397 = vmatprep.subr.mxu0 0.0
    %398 = vmatpush1.msra.mxu0 0.0
    %399 = vmatprep.mubr.f32.mxu0 0.0
    %400 = vmatmul.mubr.f32.gmra.mrb[0].mxu0 %v268
    %v401 = vpop.f32.mrb[0].mxu0
    %v402 = vadd.f32 %v323, %v401
    %v403 = vpop.f32.mrb[0].mxu0
    %v404 = vadd.f32 %v327, %v403
    %405 = vmatprep.mubr.f32.mxu0 0.0
    %406 = vmatmul.mubr.f32.gmra.mrb[0].mxu0 %v269
    %v407 = vpop.f32.mrb[0].mxu0
    %v408 = vadd.f32 %v323, %v407
    %v409 = vpop.f32.mrb[0].mxu0
    %v410 = vadd.f32 %v327, %v409
    %411 = vdwg.mxu0
    %412 = vmatprep.subr.mxu0 0.0
    %413 = vmatpush1.msra.mxu0 %v272
    %414 = vmatprep.subr.mxu0 0.0
    %415 = vmatpush1.msra.mxu0 %v275
    %416 = vmatprep.subr.mxu0 0.0
    %417 = vmatpush1.msra.mxu0 %v278
    %418 = vmatprep.subr.mxu0 0.0
    %419 = vmatpush1.msra.mxu0 %v281
    %420 = vmatprep.subr.mxu0 0.0
    %421 = vmatpush1.msra.mxu0 %v284
    %422 = vmatprep.subr.mxu0 0.0
    %423 = vmatpush1.msra.mxu0 %v287
    %424 = vmatprep.subr.mxu0 0.0
    %425 = vmatpush1.msra.mxu0 %v290
    %426 = vmatprep.subr.mxu0 0.0
    %427 = vmatpush1.msra.mxu0 %v293
    %428 = vmatprep.subr.mxu0 0.0
    %429 = vmatpush1.msra.mxu0 %v296
    %430 = vmatprep.subr.mxu0 0.0
    %431 = vmatpush1.msra.mxu0 %v299
    %432 = vmatprep.subr.mxu0 0.0
    %433 = vmatpush1.msra.mxu0 %v302
    %434 = vmatprep.subr.mxu0 0.0
    %435 = vmatpush1.msra.mxu0 %v305
    %436 = vmatprep.subr.mxu0 0.0
    %437 = vmatpush1.msra.mxu0 %v308
    %438 = vmatprep.subr.mxu0 0.0
    %439 = vmatpush1.msra.mxu0 %v311
    %440 = vmatprep.subr.mxu0 0.0
    %441 = vmatpush1.msra.mxu0 %v314
    %442 = vmatprep.subr.mxu0 0.0
    %443 = vmatpush1.msra.mxu0 %v317
    %444 = vmatprep.subr.mxu0 0.0
    %445 = vmatpush1.msra.mxu0 0.0
    %446 = vmatprep.subr.mxu0 0.0
    %447 = vmatpush1.msra.mxu0 0.0
    %448 = vmatprep.subr.mxu0 0.0
    %449 = vmatpush1.msra.mxu0 0.0
    %450 = vmatprep.subr.mxu0 0.0
    %451 = vmatpush1.msra.mxu0 0.0
    %452 = vmatprep.subr.mxu0 0.0
    %453 = vmatpush1.msra.mxu0 0.0
    %454 = vmatprep.subr.mxu0 0.0
    %455 = vmatpush1.msra.mxu0 0.0
    %456 = vmatprep.subr.mxu0 0.0
    %457 = vmatpush1.msra.mxu0 0.0
    %458 = vmatprep.subr.mxu0 0.0
    %459 = vmatpush1.msra.mxu0 0.0
    %460 = vmatprep.subr.mxu0 0.0
    %461 = vmatpush1.msra.mxu0 0.0
    %462 = vmatprep.subr.mxu0 0.0
    %463 = vmatpush1.msra.mxu0 0.0
    %464 = vmatprep.subr.mxu0 0.0
    %465 = vmatpush1.msra.mxu0 0.0
    %466 = vmatprep.subr.mxu0 0.0
    %467 = vmatpush1.msra.mxu0 0.0
    %468 = vmatprep.subr.mxu0 0.0
    %469 = vmatpush1.msra.mxu0 0.0
    %470 = vmatprep.subr.mxu0 0.0
    %471 = vmatpush1.msra.mxu0 0.0
    %472 = vmatprep.subr.mxu0 0.0
    %473 = vmatpush1.msra.mxu0 0.0
    %474 = vmatprep.subr.mxu0 0.0
    %475 = vmatpush1.msra.mxu0 0.0
    %476 = vmatprep.mubr.f32.mxu0 0.0
    %477 = vmatmul.mubr.f32.gmra.mrb[0].mxu0 %v268
    %v478 = vpop.f32.mrb[0].mxu0
    %v479 = vadd.f32 %v331, %v478
    %v480 = vpop.f32.mrb[0].mxu0
    %481 = vmatprep.mubr.f32.mxu0 0.0
    %482 = vmatmul.mubr.f32.gmra.mrb[0].mxu0 %v269
    %v483 = vpop.f32.mrb[0].mxu0
    %v484 = vadd.f32 %v331, %v483
    %v485 = vpop.f32.mrb[0].mxu0
    %486 = vdwg.mxu0
    %v487 = vld [vmem:[#allocation2] sm:$0xff]
    %v488 = vld [vmem:[#allocation2 + $0x8] sm:$0x3]
    %v489 = vld [vmem:[%s7] sm:$0xff]
    %v490 = vld [vmem:[%s7 + $0x8] sm:$0xff]
    %v491 = vld [vmem:[%s7 + $0x10] sm:$0xff]
    %v492 = vld [vmem:[%s7 + $0x18] sm:$0xff]
    %v493 = vld [vmem:[%s7 + $0x20] sm:$0xff]
    %v494 = vld [vmem:[%s7 + $0x28] sm:$0xff]
    %v495 = vld [vmem:[%s7 + $0x30] sm:$0xff]
    %v496 = vld [vmem:[%s7 + $0x38] sm:$0xff]
    %vm497 = vcmask 130048
    %v499 = vsel %vm497, %v487, 0
    %v502 = vsel %vm497, %v488, 0
    %504 = vmatprep.subr.mxu0 %v490
    %505 = vmatpush1.msra.mxu0 %v489
    %506 = vmatprep.subr.mxu0 %v494
    %507 = vmatpush1.msra.mxu0 %v493
    %508 = vmatprep.subr.mxu0 0.0
    %509 = vmatpush1.msra.mxu0 0.0
    %510 = vmatprep.subr.mxu0 0.0
    %511 = vmatpush1.msra.mxu0 0.0
    %512 = vmatprep.subr.mxu0 0.0
    %513 = vmatpush1.msra.mxu0 0.0
    %514 = vmatprep.subr.mxu0 0.0
    %515 = vmatpush1.msra.mxu0 0.0
    %516 = vmatprep.subr.mxu0 0.0
    %517 = vmatpush1.msra.mxu0 0.0
    %518 = vmatprep.subr.mxu0 0.0
    %519 = vmatpush1.msra.mxu0 0.0
    %520 = vmatprep.subr.mxu0 0.0
    %521 = vmatpush1.msra.mxu0 0.0
    %522 = vmatprep.subr.mxu0 0.0
    %523 = vmatpush1.msra.mxu0 0.0
    %524 = vmatprep.subr.mxu0 0.0
    %525 = vmatpush1.msra.mxu0 0.0
    %526 = vmatprep.subr.mxu0 0.0
    %527 = vmatpush1.msra.mxu0 0.0
    %528 = vmatprep.subr.mxu0 0.0
    %529 = vmatpush1.msra.mxu0 0.0
    %530 = vmatprep.subr.mxu0 0.0
    %531 = vmatpush1.msra.mxu0 0.0
    %532 = vmatprep.subr.mxu0 0.0
    %533 = vmatpush1.msra.mxu0 0.0
    %534 = vmatprep.subr.mxu0 0.0
    %535 = vmatpush1.msra.mxu0 0.0
    %536 = vmatprep.subr.mxu0 0.0
    %537 = vmatpush1.msra.mxu0 0.0
    %538 = vmatprep.subr.mxu0 0.0
    %539 = vmatpush1.msra.mxu0 0.0
    %540 = vmatprep.subr.mxu0 0.0
    %541 = vmatpush1.msra.mxu0 0.0
    %542 = vmatprep.subr.mxu0 0.0
    %543 = vmatpush1.msra.mxu0 0.0
    %544 = vmatprep.subr.mxu0 0.0
    %545 = vmatpush1.msra.mxu0 0.0
    %546 = vmatprep.subr.mxu0 0.0
    %547 = vmatpush1.msra.mxu0 0.0
    %548 = vmatprep.subr.mxu0 0.0
    %549 = vmatpush1.msra.mxu0 0.0
    %550 = vmatprep.subr.mxu0 0.0
    %551 = vmatpush1.msra.mxu0 0.0
    %552 = vmatprep.subr.mxu0 0.0
    %553 = vmatpush1.msra.mxu0 0.0
    %554 = vmatprep.subr.mxu0 0.0
    %555 = vmatpush1.msra.mxu0 0.0
    %556 = vmatprep.subr.mxu0 0.0
    %557 = vmatpush1.msra.mxu0 0.0
    %558 = vmatprep.subr.mxu0 0.0
    %559 = vmatpush1.msra.mxu0 0.0
    %560 = vmatprep.subr.mxu0 0.0
    %561 = vmatpush1.msra.mxu0 0.0
    %562 = vmatprep.subr.mxu0 0.0
    %563 = vmatpush1.msra.mxu0 0.0
    %564 = vmatprep.subr.mxu0 0.0
    %565 = vmatpush1.msra.mxu0 0.0
    %566 = vmatprep.subr.mxu0 0.0
    %567 = vmatpush1.msra.mxu0 0.0
    %568 = vmatprep.mubr.f32.mxu0 0.0
    %569 = vmatmul.mubr.f32.gmra.mrb[0].mxu0 %v499
    %v570 = vpop.f32.mrb[0].mxu0
    %v571 = vadd.f32 0.0, %v570
    %v572 = vpop.f32.mrb[0].mxu0
    %v573 = vadd.f32 0.0, %v572
    %574 = vmatprep.mubr.f32.mxu0 0.0
    %575 = vmatmul.mubr.f32.gmra.mrb[0].mxu0 %v502
    %v576 = vpop.f32.mrb[0].mxu0
    %v577 = vadd.f32 0.0, %v576
    %v578 = vpop.f32.mrb[0].mxu0
    %v579 = vadd.f32 0.0, %v578
    %580 = vdwg.mxu0
    %581 = vmatprep.subr.mxu0 %v492
    %582 = vmatpush1.msra.mxu0 %v491
    %583 = vmatprep.subr.mxu0 %v496
    %584 = vmatpush1.msra.mxu0 %v495
    %585 = vmatprep.subr.mxu0 0.0
    %586 = vmatpush1.msra.mxu0 0.0
    %587 = vmatprep.subr.mxu0 0.0
    %588 = vmatpush1.msra.mxu0 0.0
    %589 = vmatprep.subr.mxu0 0.0
    %590 = vmatpush1.msra.mxu0 0.0
    %591 = vmatprep.subr.mxu0 0.0
    %592 = vmatpush1.msra.mxu0 0.0
    %593 = vmatprep.subr.mxu0 0.0
    %594 = vmatpush1.msra.mxu0 0.0
    %595 = vmatprep.subr.mxu0 0.0
    %596 = vmatpush1.msra.mxu0 0.0
    %597 = vmatprep.subr.mxu0 0.0
    %598 = vmatpush1.msra.mxu0 0.0
    %599 = vmatprep.subr.mxu0 0.0
    %600 = vmatpush1.msra.mxu0 0.0
    %601 = vmatprep.subr.mxu0 0.0
    %602 = vmatpush1.msra.mxu0 0.0
    %603 = vmatprep.subr.mxu0 0.0
    %604 = vmatpush1.msra.mxu0 0.0
    %605 = vmatprep.subr.mxu0 0.0
    %606 = vmatpush1.msra.mxu0 0.0
    %607 = vmatprep.subr.mxu0 0.0
    %608 = vmatpush1.msra.mxu0 0.0
    %609 = vmatprep.subr.mxu0 0.0
    %610 = vmatpush1.msra.mxu0 0.0
    %611 = vmatprep.subr.mxu0 0.0
    %612 = vmatpush1.msra.mxu0 0.0
    %613 = vmatprep.subr.mxu0 0.0
    %614 = vmatpush1.msra.mxu0 0.0
    %615 = vmatprep.subr.mxu0 0.0
    %616 = vmatpush1.msra.mxu0 0.0
    %617 = vmatprep.subr.mxu0 0.0
    %618 = vmatpush1.msra.mxu0 0.0
    %619 = vmatprep.subr.mxu0 0.0
    %620 = vmatpush1.msra.mxu0 0.0
    %621 = vmatprep.subr.mxu0 0.0
    %622 = vmatpush1.msra.mxu0 0.0
    %623 = vmatprep.subr.mxu0 0.0
    %624 = vmatpush1.msra.mxu0 0.0
    %625 = vmatprep.subr.mxu0 0.0
    %626 = vmatpush1.msra.mxu0 0.0
    %627 = vmatprep.subr.mxu0 0.0
    %628 = vmatpush1.msra.mxu0 0.0
    %629 = vmatprep.subr.mxu0 0.0
    %630 = vmatpush1.msra.mxu0 0.0
    %631 = vmatprep.subr.mxu0 0.0
    %632 = vmatpush1.msra.mxu0 0.0
    %633 = vmatprep.subr.mxu0 0.0
    %634 = vmatpush1.msra.mxu0 0.0
    %635 = vmatprep.subr.mxu0 0.0
    %636 = vmatpush1.msra.mxu0 0.0
    %637 = vmatprep.subr.mxu0 0.0
    %638 = vmatpush1.msra.mxu0 0.0
    %639 = vmatprep.subr.mxu0 0.0
    %640 = vmatpush1.msra.mxu0 0.0
    %641 = vmatprep.subr.mxu0 0.0
    %642 = vmatpush1.msra.mxu0 0.0
    %643 = vmatprep.subr.mxu0 0.0
    %644 = vmatpush1.msra.mxu0 0.0
    %645 = vmatprep.mubr.f32.mxu0 0.0
    %646 = vmatmul.mubr.f32.gmra.mrb[0].mxu0 %v499
    %v647 = vpop.f32.mrb[0].mxu0
    %v648 = vadd.f32 0.0, %v647
    %v649 = vpop.f32.mrb[0].mxu0
    %v650 = vadd.f32 0.0, %v649
    %651 = vmatprep.mubr.f32.mxu0 0.0
    %652 = vmatmul.mubr.f32.gmra.mrb[0].mxu0 %v502
    %v653 = vpop.f32.mrb[0].mxu0
    %v654 = vadd.f32 0.0, %v653
    %v655 = vpop.f32.mrb[0].mxu0
    %v656 = vadd.f32 0.0, %v655
    %657 = vdwg.mxu0
    %v658 = vadd.f32 %v402, %v571
    %v659 = vadd.f32 %v408, %v577
    %v660 = vsub.f32 0.0, %v658
    %v661 = vsub.f32 0.0, %v659
    %v662 = vmul.f32 %v660, 1.442695
    %v663 = vpow.pop %v662
    %v664 = vmul.f32 %v661, 1.442695
    %v665 = vpow.pop %v664
    %v666 = vadd.f32 %v663, 1.0
    %v667 = vadd.f32 %v665, 1.0
    %v668 = vrcp.pop %v666
    %v669 = vmul.f32 1.0, %v668
    %v670 = vrcp.pop %v667
    %v671 = vmul.f32 1.0, %v670
    %v672 = vadd.f32 %v404, %v573
    %v673 = vadd.f32 %v410, %v579
    %v674 = vsub.f32 0.0, %v672
    %v675 = vsub.f32 0.0, %v673
    %v676 = vmul.f32 %v674, 1.442695
    %v677 = vpow.pop %v676
    %v678 = vmul.f32 %v675, 1.442695
    %v679 = vpow.pop %v678
    %v680 = vadd.f32 %v677, 1.0
    %v681 = vadd.f32 %v679, 1.0
    %v682 = vrcp.pop %v680
    %v683 = vmul.f32 1.0, %v682
    %v684 = vrcp.pop %v681
    %v685 = vmul.f32 1.0, %v684
    %v686 = vld [vmem:[%s9] sm:$0x1]
    %v688 = vlaneseq
    %v689 = vshrl.u32 %v688, 7
    %v690 = vsub.s32 0, %v689
    %v691 = vrot.slane %v686, %v690
    %v693 = vadd.f32 %v648, %v691
    %v694 = vadd.f32 %v654, %v691
    %v695 = vmul.f32 %v669, %v693
    %v696 = vmul.f32 %v671, %v694
    %v697 = vadd.f32 %v479, %v695
    %v698 = vadd.f32 %v484, %v696
    %v699 = vtanh.pop %v697
    %v700 = vtanh.pop %v698
    %v701 = vsub.f32 1.0, %v683
    %v702 = vsub.f32 1.0, %v685
    %v703 = vmul.f32 %v701, %v699
    %v704 = vmul.f32 %v702, %v700
    %v705 = vmul.f32 %v683, %v650
    %v706 = vmul.f32 %v685, %v656
    %v707 = vadd.f32 %v703, %v705
    %v708 = vadd.f32 %v704, %v706
    %709 = vst [vmem:[#allocation8] sm:$0xff] %v707
    %710 = vst [vmem:[#allocation8 + $0x8] sm:$0x3] %v708
    // Predicated region
    $region54: #{tpu_custom_call.1} parent=1 // pred_check
      _
    $region55: #{tpu_custom_call.1} parent=1 // pred_check_branch
      %712 = sbr.rel (0) target = $region57
    $region56: #{tpu_custom_call.1} parent=1 // pred_region
      %s714 = ssub.s32 256, 256
      %715 = vsyncadd [#allocation4], %s714
      %s716 = sshll.u32 [#allocation8], 4
      %s717 = int_to_ptr.vmem [resolvable:$true] %s716
      %722 = dma.vmem_to_hbm [thread:$0]  %s717, 256, %s10, [#allocation4], 128, 128, 8
    $region57: #{tpu_custom_call.1} parent=1 // pred_fallthru
      _
    // Predicated region
    $region58: #{tpu_custom_call.1} parent=1 // pred_check
      _
    $region59: #{tpu_custom_call.1} parent=1 // pred_check_branch
      %724 = sbr.rel (0) target = $region61
    $region60: #{tpu_custom_call.1} parent=1 // pred_region
      %725 = dma.done [#allocation4], 256
    $region61: #{tpu_custom_call.1} parent=1 // pred_fallthru
      _
    %726 = vsyncpa [#allocation3], 1
    %727 = vsyncpa [#allocation6], 1
    %728 = vsyncpa [#allocation4], 1

</llo_original>
